<compile_context>
chip_gen: v7x
topology: tpu7x:2x2x1
jax: 0.10.0
libtpu: 0.0.40
codegen_flags: <defaults>
</compile_context>

<pallas_src>
import jax
import jax.numpy as jnp
from jax.experimental import pallas as pl
from jax.experimental.pallas import tpu as pltpu

_LANES = 128
_TILE_ROWS = 4096  # 4096 x 128 f32 = 2 MiB per input block (review: 2048-4096)


def _make_mf_loss_kernel(tile_rows, valid_rows_last, inv_n):
    """Builds the grid-reduction kernel with all scalars baked in statically."""
    needs_row_mask = valid_rows_last != tile_rows

    def kernel(pos_ref, neg_ref, out_ref, acc_ref):
        # pos_ref / neg_ref : VMEM (tile_rows, 128), native dtype
        # out_ref           : VMEM (1, 1) f32, written on the last step only
        # acc_ref           : VMEM (8, 128) f32, single-vreg accumulator
        pid = pl.program_id(0)
        last_pid = pl.num_programs(0) - 1

        @pl.when(pid == 0)
        def _init():
            acc_ref[...] = jnp.zeros_like(acc_ref)

        pos = pos_ref[...].astype(jnp.float32)  # upcast on the VPU, not in HBM
        neg = neg_ref[...].astype(jnp.float32)
        d = pos - 1.0
        val = d * d + neg * neg  # elementwise, VPU only

        def _accumulate(v):
            # Fold (tile_rows, 128) into one (8, 128) vreg: pure VPU adds,
            # no cross-lane traffic, 4 KiB accumulator instead of tile-sized.
            acc_ref[...] += v.reshape(-1, 8, _LANES).sum(axis=0)

        if needs_row_mask:
            # Only the last grid block overhangs the array; mask its
            # out-of-bounds rows (select, so garbage never propagates).
            @pl.when(pid < last_pid)
            def _acc_full():
                _accumulate(val)

            @pl.when(pid == last_pid)
            def _acc_masked():
                row = jax.lax.broadcasted_iota(jnp.int32, val.shape, 0)
                _accumulate(jnp.where(row < valid_rows_last, val, 0.0))
        else:
            _accumulate(val)

        @pl.when(pid == last_pid)
        def _finalize():
            total = jnp.sum(acc_ref[...])  # the one cross-lane/sublane reduce
            out_ref[...] = (total * inv_n).reshape(1, 1)

    return kernel


def mf_loss(pos_score, neg_score, gamma=1e-10):
    """Pallas TPU implementation of MFLoss.forward.

    loss = mean((pos_score - 1)^2) + mean(neg_score^2)
    """
    del gamma  # unused by the PyTorch forward; kept for API parity
    assert pos_score.shape == neg_score.shape
    assert pos_score.ndim == 1
    n = pos_score.shape[0]
    assert n > 0

    pos = pos_score
    neg = neg_score

    # Pad only when N is not 128-aligned, with NEUTRAL values so padded
    # elements contribute exactly zero (no lane mask needed in the kernel).
    n_pad = ((n + _LANES - 1) // _LANES) * _LANES
    if n_pad != n:
        pad = n_pad - n
        pos = jnp.pad(pos, (0, pad), constant_values=1.0)  # (1-1)^2 == 0
        neg = jnp.pad(neg, (0, pad), constant_values=0.0)  # 0^2     == 0
    rows = n_pad // _LANES
    pos2d = pos.reshape(rows, _LANES)
    neg2d = neg.reshape(rows, _LANES)

    # Sublane granularity of the native dtype (8 for f32, 16 for bf16, ...).
    itemsize = jnp.dtype(pos2d.dtype).itemsize
    sub_gran = max(8, 32 // itemsize)

    if rows >= _TILE_ROWS:
        tile_rows = _TILE_ROWS
    else:
        tile_rows = ((rows + sub_gran - 1) // sub_gran) * sub_gran
    num_tiles = pl.cdiv(rows, tile_rows)
    valid_rows_last = rows - (num_tiles - 1) * tile_rows  # static Python int
    inv_n = 1.0 / float(n)                                # static Python float

    kernel = _make_mf_loss_kernel(tile_rows, valid_rows_last, inv_n)

    out = pl.pallas_call(
        kernel,
        out_shape=jax.ShapeDtypeStruct((1, 1), jnp.float32),
        grid_spec=pltpu.PrefetchScalarGridSpec(
            num_scalar_prefetch=0,
            grid=(num_tiles,),
            in_specs=[
                pl.BlockSpec((tile_rows, _LANES), lambda i: (i, 0)),
                pl.BlockSpec((tile_rows, _LANES), lambda i: (i, 0)),
            ],
            out_specs=pl.BlockSpec((1, 1), lambda i: (0, 0)),
            scratch_shapes=[pltpu.VMEM((8, _LANES), jnp.float32)],
        ),
        compiler_params=pltpu.CompilerParams(
            dimension_semantics=("arbitrary",)),
    )(pos2d, neg2d)

    return out[0, 0]


def _mf_loss_ref(pos_score, neg_score, gamma=1e-10):
    del gamma
    pos = pos_score.astype(jnp.float32)
    neg = neg_score.astype(jnp.float32)
    return jnp.mean((pos - 1.0) ** 2) + jnp.mean(neg ** 2)


if __name__ == "__main__":
    key = jax.random.PRNGKey(0)

    # Small shape consistent with the module: (N,) scores.
    k1, k2 = jax.random.split(key)
    N = 8
    pos_score = jax.random.normal(k1, (N,), dtype=jnp.float32)
    neg_score = jax.random.normal(k2, (N,), dtype=jnp.float32)

    loss = jax.block_until_ready(mf_loss(pos_score, neg_score))
    ref = _mf_loss_ref(pos_score, neg_score)
    assert jnp.allclose(loss, ref, atol=1e-5, rtol=1e-5), (loss, ref)

    # Unaligned N: exercises neutral-value padding + partial-block row mask.
    k3, k4 = jax.random.split(k2)
    N2 = 70_000
    pos2 = jax.random.normal(k3, (N2,), dtype=jnp.float32)
    neg2 = jax.random.normal(k4, (N2,), dtype=jnp.float32)
    loss2 = jax.block_until_ready(mf_loss(pos2, neg2))
    ref2 = _mf_loss_ref(pos2, neg2)
    assert jnp.allclose(loss2, ref2, atol=1e-4, rtol=1e-4), (loss2, ref2)

    # Aligned multi-tile N: exercises the pad-free, mask-free multi-step grid.
    k5, k6 = jax.random.split(k4)
    N3 = 2 * _TILE_ROWS * _LANES  # rows = 8192 -> grid of 2 full tiles
    pos3 = jax.random.normal(k5, (N3,), dtype=jnp.float32)
    neg3 = jax.random.normal(k6, (N3,), dtype=jnp.float32)
    loss3 = jax.block_until_ready(mf_loss(pos3, neg3))
    ref3 = _mf_loss_ref(pos3, neg3)
    assert jnp.allclose(loss3, ref3, atol=1e-4, rtol=1e-4), (loss3, ref3)

    print("KERNEL_OK")
</pallas_src>

<mosaic_0001>
module attributes {stable_mosaic.version = 11 : i64} {
  func.func @kernel(%arg0: i32, %arg1: memref<8x128xf32, #tpu.memory_space<vmem>>, %arg2: memref<8x128xf32, #tpu.memory_space<vmem>>, %arg3: memref<1x1xf32, #tpu.memory_space<vmem>>, %arg4: memref<8x128xf32, #tpu.memory_space<vmem>>) attributes {dimension_semantics = [#tpu.dimension_semantics<arbitrary>], iteration_bounds = array<i64: 1>, scalar_prefetch = 0 : i64, scratch_operands = 1 : i64, tpu.core_type = #tpu.core_type<tc>, window_params = [{transform_indices = @transform_0, window_bounds = array<i64: 8, 128>}, {transform_indices = @transform_1, window_bounds = array<i64: 8, 128>}, {pipeline_mode = #tpu.pipeline_mode<synchronous>, transform_indices = @transform_2, window_bounds = array<i64: 1, 1>}]} {
    %c0_i32 = arith.constant 0 : i32
    %0 = arith.cmpi eq, %arg0, %c0_i32 : i32
    %1 = arith.extui %0 : i1 to i32
    %c0_i32_0 = arith.constant 0 : i32
    %2 = arith.cmpi ne, %1, %c0_i32_0 : i32
    scf.if %2 {
      %cst_10 = arith.constant 0.000000e+00 : f32
      %19 = vector.broadcast %cst_10 : f32 to vector<8x128xf32>
      %c0_11 = arith.constant 0 : index
      %c0_12 = arith.constant 0 : index
      %20 = vector.load %arg4[%c0_11, %c0_12] : memref<8x128xf32, #tpu.memory_space<vmem>>, vector<8x128xf32>
      tpu.vector_store %arg4[%c0_11, %c0_12], %19 {strides = array<i32>} : memref<8x128xf32, #tpu.memory_space<vmem>>, vector<8x128xf32>,
    } else {
    }
    %c0 = arith.constant 0 : index
    %c0_1 = arith.constant 0 : index
    %3 = vector.load %arg1[%c0, %c0_1] : memref<8x128xf32, #tpu.memory_space<vmem>>, vector<8x128xf32>
    %c0_2 = arith.constant 0 : index
    %c0_3 = arith.constant 0 : index
    %4 = vector.load %arg2[%c0_2, %c0_3] : memref<8x128xf32, #tpu.memory_space<vmem>>, vector<8x128xf32>
    %cst = arith.constant 1.000000e+00 : f32
    %5 = vector.broadcast %cst : f32 to vector<8x128xf32>
    %6 = arith.subf %3, %5 : vector<8x128xf32>
    %7 = arith.mulf %6, %6 : vector<8x128xf32>
    %8 = arith.mulf %4, %4 : vector<8x128xf32>
    %9 = arith.addf %7, %8 : vector<8x128xf32>
    %c0_i32_4 = arith.constant 0 : i32
    %10 = arith.cmpi slt, %arg0, %c0_i32_4 : i32
    %11 = arith.extui %10 : i1 to i32
    %c0_i32_5 = arith.constant 0 : i32
    %12 = arith.cmpi ne, %11, %c0_i32_5 : i32
    scf.if %12 {
      %c0_10 = arith.constant 0 : index
      %c0_11 = arith.constant 0 : index
      %19 = vector.load %arg4[%c0_10, %c0_11] : memref<8x128xf32, #tpu.memory_space<vmem>>, vector<8x128xf32>
      %20 = vector.shape_cast %9 : vector<8x128xf32> to vector<1x8x128xf32>
      %cst_12 = arith.constant dense<0.000000e+00> : vector<8x128xf32>
      %21 = vector.multi_reduction <add>, %20, %cst_12 [0] : vector<1x8x128xf32> to vector<8x128xf32>
      %22 = arith.addf %19, %21 : vector<8x128xf32>
      %c0_13 = arith.constant 0 : index
      %c0_14 = arith.constant 0 : index
      %23 = vector.load %arg4[%c0_13, %c0_14] : memref<8x128xf32, #tpu.memory_space<vmem>>, vector<8x128xf32>
      tpu.vector_store %arg4[%c0_13, %c0_14], %22 {strides = array<i32>} : memref<8x128xf32, #tpu.memory_space<vmem>>, vector<8x128xf32>,
    } else {
    }
    %c0_i32_6 = arith.constant 0 : i32
    %13 = arith.cmpi eq, %arg0, %c0_i32_6 : i32
    %14 = arith.extui %13 : i1 to i32
    %c0_i32_7 = arith.constant 0 : i32
    %15 = arith.cmpi ne, %14, %c0_i32_7 : i32
    scf.if %15 {
      %19 = tpu.iota {dimensions = array<i32: 0>} : vector<8x128xi32>
      %c1_i32 = arith.constant 1 : i32
      %20 = vector.broadcast %c1_i32 : i32 to vector<8x128xi32>
      %21 = arith.cmpi slt, %19, %20 : vector<8x128xi32>
      %cst_10 = arith.constant 0.000000e+00 : f32
      %22 = vector.broadcast %cst_10 : f32 to vector<8x128xf32>
      %23 = arith.select %21, %9, %22 : vector<8x128xi1>, vector<8x128xf32>
      %c0_11 = arith.constant 0 : index
      %c0_12 = arith.constant 0 : index
      %24 = vector.load %arg4[%c0_11, %c0_12] : memref<8x128xf32, #tpu.memory_space<vmem>>, vector<8x128xf32>
      %25 = vector.shape_cast %23 : vector<8x128xf32> to vector<1x8x128xf32>
      %cst_13 = arith.constant dense<0.000000e+00> : vector<8x128xf32>
      %26 = vector.multi_reduction <add>, %25, %cst_13 [0] : vector<1x8x128xf32> to vector<8x128xf32>
      %27 = arith.addf %24, %26 : vector<8x128xf32>
      %c0_14 = arith.constant 0 : index
      %c0_15 = arith.constant 0 : index
      %28 = vector.load %arg4[%c0_14, %c0_15] : memref<8x128xf32, #tpu.memory_space<vmem>>, vector<8x128xf32>
      tpu.vector_store %arg4[%c0_14, %c0_15], %27 {strides = array<i32>} : memref<8x128xf32, #tpu.memory_space<vmem>>, vector<8x128xf32>,
    } else {
    }
    %c0_i32_8 = arith.constant 0 : i32
    %16 = arith.cmpi eq, %arg0, %c0_i32_8 : i32
    %17 = arith.extui %16 : i1 to i32
    %c0_i32_9 = arith.constant 0 : i32
    %18 = arith.cmpi ne, %17, %c0_i32_9 : i32
    scf.if %18 {
      %c0_10 = arith.constant 0 : index
      %c0_11 = arith.constant 0 : index
      %19 = vector.load %arg4[%c0_10, %c0_11] : memref<8x128xf32, #tpu.memory_space<vmem>>, vector<8x128xf32>
      %20 = vector.shape_cast %19 : vector<8x128xf32> to vector<1x8x128xf32>
      %cst_12 = arith.constant dense<0.000000e+00> : vector<1xf32>
      %21 = vector.multi_reduction <add>, %20, %cst_12 [1, 2] : vector<1x8x128xf32> to vector<1xf32>
      %22 = vector.shape_cast %21 : vector<1xf32> to vector<1x1x1xf32>
      %23 = vector.extract %22[0, 0, 0] : f32 from vector<1x1x1xf32>
      %cst_13 = arith.constant 1.250000e-01 : f32
      %24 = arith.mulf %23, %cst_13 : f32
      %25 = vector.broadcast %24 : f32 to vector<1x1xf32>
      %c0_14 = arith.constant 0 : index
      %c0_15 = arith.constant 0 : index
      %26 = vector.load %arg3[%c0_14, %c0_15] : memref<1x1xf32, #tpu.memory_space<vmem>>, vector<1x1xf32>
      tpu.vector_store %arg3[%c0_14, %c0_15], %25 {strides = array<i32>} : memref<1x1xf32, #tpu.memory_space<vmem>>, vector<1x1xf32>,
    } else {
    }
    return
  }
  func.func @transform_0(%arg0: i32) -> (i32, i32) {
    %c0_i32 = arith.constant 0 : i32
    %c0_i32_0 = arith.constant 0 : i32
    return %arg0, %c0_i32 : i32, i32
  }
  func.func @transform_1(%arg0: i32) -> (i32, i32) {
    %c0_i32 = arith.constant 0 : i32
    %c0_i32_0 = arith.constant 0 : i32
    return %arg0, %c0_i32 : i32, i32
  }
  func.func @transform_2(%arg0: i32) -> (i32, i32) {
    %c0_i32 = arith.constant 0 : i32
    %c0_i32_0 = arith.constant 0 : i32
    %c0_i32_1 = arith.constant 0 : i32
    return %c0_i32, %c0_i32_0 : i32, i32
  }
}

</mosaic_0001>

<llo_original>
// kernel: tpu_custom_call.1
$region0: #{tpu_custom_call.1}
  #allocation0 [shape = 'u32[]', space=smem, size = 0x4, offset = 0x4, fixed_abs, tag = 'smem constant byte address 0x4 - core index']
  #allocation1 [shape = 'u32[144,128]{1,0:T(1,128)}', space=vmem, size = 0x12000, scoped, tag = 'internal scratch']
  #allocation2 [shape = 'f32[8,128]{1,0:T(8,128)}', space=vmem, size = 0x1000, scoped, tag = 'scratch operand']
  %s0 = inlined_call_operand.hbm [shape: f32[1,128], index: 0, kind: input, shape index: {}]
  %s1 = inlined_call_operand.vmem [shape: f32[1,128], index: 1, kind: input, shape index: {}]
  %s2 = inlined_call_operand.hbm [shape: f32[1,1], index: 2, kind: output, shape index: {}]
  %s3 = sld [smem:[#allocation0]]
  $region34: #{tpu_custom_call.1} parent=0
    _
  %s5 = ssub.s32 1, %s3
  %s6 = scalar_select 0, %s5, %s3
  $region1: #{tpu_custom_call.1} parent=0
    #allocation3 [shape = 'u8[4096]{0}', space=vmem, size = 0x1000, scoped, tag = 'input window, operand 0, single buffered']
    #allocation4 [shape = 's32[1]{0}', space=sflag, size = 0x4, scoped, tag = 'scoped memory for tpu_custom_call.1']
    #allocation5 [shape = 's32[1]{0}', space=sflag, size = 0x4, scoped, tag = 'scoped memory for tpu_custom_call.1']
    #allocation6 [shape = 'u8[512]{0}', space=vmem, size = 0x400, scoped, tag = 'output window, operand 0, single buffered']
    %7 = vsyncpa [#allocation4], 0
    %8 = vsyncpa [#allocation5], 0
    // Predicated region
    $region2: #{tpu_custom_call.1} parent=1 // pred_check
      _
    $region3: #{tpu_custom_call.1} parent=1 // pred_check_branch
      %10 = sbr.rel (0) target = $region5
    $region4: #{tpu_custom_call.1} parent=1 // pred_region
      %s12 = ssub.s32 128, 16
      %13 = vsyncadd [#allocation4], %s12
      %s14 = sshll.u32 [#allocation3], 4
      %s15 = int_to_ptr.vmem [resolvable:$true] %s14
      %20 = dma.hbm_to_vmem [thread:$0]  %s0, 16, %s15, [#allocation4], 16, 16, 1
    $region5: #{tpu_custom_call.1} parent=1 // pred_fallthru
      _
    // Predicated region
    $region6: #{tpu_custom_call.1} parent=1 // pred_check
      _
    $region7: #{tpu_custom_call.1} parent=1 // pred_check_branch
      %22 = sbr.rel (0) target = $region9
    $region8: #{tpu_custom_call.1} parent=1 // pred_region
      _
    $region9: #{tpu_custom_call.1} parent=1 // pred_fallthru
      _
    // Predicated region
    $region10: #{tpu_custom_call.1} parent=1 // pred_check
      _
    $region11: #{tpu_custom_call.1} parent=1 // pred_check_branch
      %24 = sbr.rel (0) target = $region13
    $region12: #{tpu_custom_call.1} parent=1 // pred_region
      %25 = dma.done [#allocation4], 128
    $region13: #{tpu_custom_call.1} parent=1 // pred_fallthru
      _
    %p26 = scmp.eq.s32.totalorder 0, 0
    // Predicated region
    $region14: #{tpu_custom_call.1} parent=1 // pred_check
      %p27 = pneg %p26
    $region15: #{tpu_custom_call.1} parent=1 // pred_check_branch
      %29 = sbr.rel (%p27) target = $region17
    $region16: #{tpu_custom_call.1} parent=1 // pred_region
      %30 = vst [vmem:[#allocation2] sm:$0xff] 0.0
    $region17: #{tpu_custom_call.1} parent=1 // pred_fallthru
      _
    %v31 = vld [vmem:[#allocation3] sm:$0xff]
    %v32 = vld [vmem:[%s1] sm:$0xff]
    %v33 = vsub.f32 %v31, 1.0
    %v34 = vmul.f32 %v33, %v33
    %v35 = vmul.f32 %v32, %v32
    %v36 = vadd.f32 %v34, %v35
    %p37 = scmp.lt.s32.totalorder 0, 0
    // Predicated region
    $region18: #{tpu_custom_call.1} parent=1 // pred_check
      %p38 = pneg %p37
    $region19: #{tpu_custom_call.1} parent=1 // pred_check_branch
      %40 = sbr.rel (%p38) target = $region21
    $region20: #{tpu_custom_call.1} parent=1 // pred_region
      %v41 = vld [vmem:[#allocation2] sm:$0xff]
      %v42 = vadd.f32 %v36, 0.0
      %v43 = vadd.f32 %v41, %v42
      %44 = vst [vmem:[#allocation2] sm:$0xff] %v43
    $region21: #{tpu_custom_call.1} parent=1 // pred_fallthru
      _
    // Predicated region
    $region22: #{tpu_custom_call.1} parent=1 // pred_check
      %p45 = pneg %p26
    $region23: #{tpu_custom_call.1} parent=1 // pred_check_branch
      %47 = sbr.rel (%p45) target = $region25
    $region24: #{tpu_custom_call.1} parent=1 // pred_region
      %v48 = vlaneseq
      %v49 = vshrl.u32 %v48, 7
      %vm50 = vcmp.lt.s32.totalorder %v49, 1
      %v51 = vsel %vm50, %v36, 0.0
      %v52 = vld [vmem:[#allocation2] sm:$0xff]
      %v53 = vadd.f32 %v51, 0.0
      %v54 = vadd.f32 %v52, %v53
      %55 = vst [vmem:[#allocation2] sm:$0xff] %v54
      %v56 = vld [vmem:[#allocation2] sm:$0xff]
      %57 = vadd.xlane.f32.xlu0 %v56
      %v58 = vpop.xlane.xlu0 %57
      %v59 = vrot.slane %v58, 4
      %v60 = vadd.f32 %v58, %v59
      %v61 = vrot.slane %v60, 2
      %v62 = vadd.f32 %v60, %v61
      %v63 = vrot.slane %v62, 1
      %v64 = vadd.f32 %v62, %v63
      %s65 = vtos %v64
      %s66 = smul.f32 %s65, 0.125
      %v67 = vstv %s66
      %vm68 = vcmask 0
      %69 = vst.msk [vmem:[#allocation6] sm:$0x1] %vm68, %v67
    $region25: #{tpu_custom_call.1} parent=1 // pred_fallthru
      _
    // Predicated region
    $region26: #{tpu_custom_call.1} parent=1 // pred_check
      _
    $region27: #{tpu_custom_call.1} parent=1 // pred_check_branch
      %71 = sbr.rel (0) target = $region29
    $region28: #{tpu_custom_call.1} parent=1 // pred_region
      %s73 = ssub.s32 16, 16
      %74 = vsyncadd [#allocation5], %s73
      %s76 = sshll.u32 [#allocation6], 4
      %s77 = int_to_ptr.vmem [resolvable:$true] %s76
      %79 = dma.vmem_to_hbm [thread:$0]  %s77, 16, %s2, [#allocation5]
    $region29: #{tpu_custom_call.1} parent=1 // pred_fallthru
      _
    // Predicated region
    $region30: #{tpu_custom_call.1} parent=1 // pred_check
      _
    $region31: #{tpu_custom_call.1} parent=1 // pred_check_branch
      %81 = sbr.rel (0) target = $region33
    $region32: #{tpu_custom_call.1} parent=1 // pred_region
      %82 = dma.done [#allocation5], 16
    $region33: #{tpu_custom_call.1} parent=1 // pred_fallthru
      _
    %83 = vsyncpa [#allocation4], 1
    %84 = vsyncpa [#allocation5], 1

</llo_original>
